<compile_context>
chip_gen: v5e
topology: v5e:2x2
jax: 0.10.0
libtpu: 0.0.40
codegen_flags: <defaults>
</compile_context>

<pallas_src>
import functools
import numpy as np
import jax
import jax.numpy as jnp
from jax.experimental import pallas as pl
from jax.experimental.pallas import tpu as pltpu


# ----------------------------------------------------------------------------
# Host-side helpers
# ----------------------------------------------------------------------------
def _bilinear_matrix(out_size, in_size):
    """1-D interpolation matrix matching F.interpolate(mode='bilinear',
    align_corners=False) along a single axis."""
    if out_size == in_size:
        return np.eye(out_size, dtype=np.float32)
    scale = in_size / out_size
    dst = np.arange(out_size, dtype=np.float64)
    src = (dst + 0.5) * scale - 0.5
    src = np.maximum(src, 0.0)                       # PyTorch clamps negative coords
    i0 = np.minimum(np.floor(src).astype(np.int64), in_size - 1)
    i1 = np.minimum(i0 + 1, in_size - 1)
    lam = (src - i0).astype(np.float32)
    R = np.zeros((out_size, in_size), dtype=np.float32)
    np.add.at(R, (np.arange(out_size), i0), 1.0 - lam)
    np.add.at(R, (np.arange(out_size), i1), lam)
    return R


def _round_up(x, m):
    return (x + m - 1) // m * m


def init_params(key, mae_dim, conv_dim, out_dim):
    """Deterministic synthetic parameters.  All matmul weights stored (in, out)."""
    ks = jax.random.split(key, 11)

    def w(k, shape, fan_in):
        return jax.random.normal(k, shape, jnp.float32) / np.sqrt(fan_in)

    return dict(
        wm=w(ks[0], (mae_dim, out_dim), mae_dim),      # mae_proj  (1x1 conv)
        bm=w(ks[1], (1, out_dim), mae_dim),
        wc=w(ks[2], (conv_dim, out_dim), conv_dim),    # conv_proj (1x1 conv)
        bc=w(ks[3], (1, out_dim), conv_dim),
        wa1m=w(ks[4], (out_dim, out_dim), 2 * out_dim),  # attn conv1 split weights
        wa1c=w(ks[5], (out_dim, out_dim), 2 * out_dim),
        ba1=w(ks[6], (1, out_dim), 2 * out_dim),
        wa2=w(ks[7], (out_dim, 2), out_dim),           # attn conv2 -> 2 maps
        ba2=w(ks[8], (1, 2), out_dim),
        wo=w(ks[9], (out_dim, out_dim), out_dim),      # output_proj conv
        bo=w(ks[10], (1, out_dim), out_dim),
        gamma=jnp.ones((1, out_dim), jnp.float32),     # BatchNorm2d defaults
        beta=jnp.zeros((1, out_dim), jnp.float32),
    )


# ----------------------------------------------------------------------------
# Pallas kernels
# ----------------------------------------------------------------------------
def _resize_proj_kernel(r_ref, mae_ref, wm_ref, bm_ref, out_ref):
    # project THEN resize:  out[b] = R @ (mae[b] @ Wm) + bm
    proj = jnp.dot(mae_ref[0], wm_ref[...], preferred_element_type=jnp.float32)
    res = jnp.dot(r_ref[...], proj.astype(jnp.bfloat16),
                  preferred_element_type=jnp.float32)
    out_ref[0] = (res + bm_ref[...]).astype(out_ref.dtype)


def _fusion_kernel(mae_ref, conv_ref, w1_ref, b1_ref, wo2_ref, b2_ref,
                   y_ref, sum_ref, csq_ref, *, co, p_total):
    pid = pl.program_id(0)
    tile = y_ref.shape[0]

    mae_bf = mae_ref[...]                                # (tile, Co) bf16, bias included
    conv_bf = conv_ref[...]                              # (tile, Cc) bf16
    xcat = jnp.concatenate([mae_bf, conv_bf], axis=-1)   # (tile, Co+Cc)

    # single fused MXU dot -> [attn-hidden (pre-ReLU) | conv_proj]
    big = (jnp.dot(xcat, w1_ref[...], preferred_element_type=jnp.float32)
           + b1_ref[...])
    hid = jnp.maximum(big[:, :co], 0.0)
    conv_p = big[:, co:]

    wo2 = wo2_ref[...]                                   # (Co, Co+1) bf16
    wo = wo2[:, :co]
    w2 = wo2[:, co:co + 1]
    b2v = b2_ref[...]                                    # (1, Co+1) f32
    bo = b2v[:, :co]
    b2 = b2v[:, co:co + 1]

    # 2-way softmax == sigmoid of the logit difference (single 1-wide dot, no XLU reduce)
    logit = (jnp.dot(hid.astype(jnp.bfloat16), w2,
                     preferred_element_type=jnp.float32) + b2)
    w0 = 1.0 / (1.0 + jnp.exp(-logit))                   # f32 elementwise (v5e-safe)

    mae_p = mae_bf.astype(jnp.float32)
    fused = w0 * mae_p + (1.0 - w0) * conv_p
    y = (jnp.dot(fused.astype(jnp.bfloat16), wo,
                 preferred_element_type=jnp.float32) + bo)
    y_ref[...] = y.astype(y_ref.dtype)

    # per-tile masked BatchNorm statistics (centered / Welford-style, combined on host)
    row = jax.lax.broadcasted_iota(jnp.int32, (tile, 1), 0) + pid * tile
    valid = row < p_total
    cnt = jnp.maximum(jnp.sum(valid.astype(jnp.float32), keepdims=True), 1.0)
    s = jnp.sum(jnp.where(valid, y, 0.0), axis=0, keepdims=True)       # (1, Co)
    mu = s / cnt
    d = jnp.where(valid, y - mu, 0.0)
    c = jnp.sum(d * d, axis=0, keepdims=True)                          # (1, Co)
    sum_ref[...] = s[None]
    csq_ref[...] = c[None]


def _bn_relu_kernel(y_ref, scale_ref, shift_ref, o_ref):
    y = y_ref[...].astype(jnp.float32)
    o_ref[...] = jnp.maximum(y * scale_ref[...] + shift_ref[...], 0.0)


# ----------------------------------------------------------------------------
# Wrapper (forward pass)
# ----------------------------------------------------------------------------
def spatial_fusion_forward(params, mae_spatial, conv_feat, *, tile_p=512, eps=1e-5):
    B, N, D = mae_spatial.shape
    H_mae = W_mae = int(round(N ** 0.5))
    _, Cc, H, W = conv_feat.shape
    Co = params["wo"].shape[1]
    HW = H * W
    P = B * HW
    bf16 = jnp.bfloat16

    # ---- host-side weight fusion (tiny, trace-time) --------------------------
    wc, wa1m, wa1c = params["wc"], params["wa1m"], params["wa1c"]
    w1 = jnp.concatenate(
        [jnp.concatenate([wa1m, jnp.zeros((Co, Co), jnp.float32)], axis=1),
         jnp.concatenate([wc @ wa1c, wc], axis=1)], axis=0)              # (Co+Cc, 2Co)
    b1 = jnp.concatenate([params["bc"] @ wa1c + params["ba1"], params["bc"]],
                         axis=1)                                          # (1, 2Co)
    w2d = params["wa2"][:, 0:1] - params["wa2"][:, 1:2]                   # (Co, 1)
    b2d = params["ba2"][:, 0:1] - params["ba2"][:, 1:2]                   # (1, 1)
    wo2 = jnp.concatenate([params["wo"], w2d], axis=1)                    # (Co, Co+1)
    b2 = jnp.concatenate([params["bo"], b2d], axis=1)                     # (1, Co+1)

    # ---- project-then-resize the MAE tokens (one batch element / grid step) --
    Rfull = jnp.asarray(np.kron(_bilinear_matrix(H, H_mae),
                                _bilinear_matrix(W, W_mae)), dtype=bf16)  # (HW, N)
    mae_rows = pl.pallas_call(
        _resize_proj_kernel,
        out_shape=jax.ShapeDtypeStruct((B, HW, Co), bf16),
        grid_spec=pltpu.PrefetchScalarGridSpec(
            num_scalar_prefetch=0, grid=(B,),
            in_specs=[pl.BlockSpec((HW, N), lambda b: (0, 0)),
                      pl.BlockSpec((1, N, D), lambda b: (b, 0, 0)),
                      pl.BlockSpec((D, Co), lambda b: (0, 0)),
                      pl.BlockSpec((1, Co), lambda b: (0, 0))],
            out_specs=pl.BlockSpec((1, HW, Co), lambda b: (b, 0, 0))),
        compiler_params=pltpu.CompilerParams(dimension_semantics=("parallel",)),
    )(Rfull, mae_spatial.astype(bf16), params["wm"].astype(bf16), params["bm"])
    mae_rows = mae_rows.reshape(P, Co)

    conv_rows = jnp.transpose(conv_feat, (0, 2, 3, 1)).reshape(P, Cc).astype(bf16)

    # ---- fused projection / attention / output-proj over large row tiles -----
    # NOTE: at realistic dims (D=768, Co=768) cap tile_p and set vmem_limit_bytes
    # on v7x (64 MiB VMEM) so the double-buffered tiles fit.
    tile = min(int(tile_p), _round_up(P, 8))
    n_tiles = pl.cdiv(P, tile)
    row = lambda i: (i, 0)
    full = lambda i: (0, 0)
    stat = lambda i: (i, 0, 0)

    fusion = functools.partial(_fusion_kernel, co=Co, p_total=P)
    y_pre, tsum, tcsq = pl.pallas_call(
        fusion,
        out_shape=(jax.ShapeDtypeStruct((P, Co), bf16),
                   jax.ShapeDtypeStruct((n_tiles, 1, Co), jnp.float32),
                   jax.ShapeDtypeStruct((n_tiles, 1, Co), jnp.float32)),
        grid_spec=pltpu.PrefetchScalarGridSpec(
            num_scalar_prefetch=0, grid=(n_tiles,),
            in_specs=[pl.BlockSpec((tile, Co), row),
                      pl.BlockSpec((tile, Cc), row),
                      pl.BlockSpec((Co + Cc, 2 * Co), full),
                      pl.BlockSpec((1, 2 * Co), full),
                      pl.BlockSpec((Co, Co + 1), full),
                      pl.BlockSpec((1, Co + 1), full)],
            out_specs=[pl.BlockSpec((tile, Co), row),
                       pl.BlockSpec((1, 1, Co), stat),
                       pl.BlockSpec((1, 1, Co), stat)]),
        compiler_params=pltpu.CompilerParams(dimension_semantics=("parallel",)),
    )(mae_rows, conv_rows, w1.astype(bf16), b1, wo2.astype(bf16), b2)

    # ---- BatchNorm2d (training-mode batch stats, biased var): Welford combine --
    counts = jnp.asarray(
        np.minimum(tile, P - np.arange(n_tiles) * tile).astype(np.float32))[:, None]
    tsum2 = tsum[:, 0, :]
    tcsq2 = tcsq[:, 0, :]
    tmean = tsum2 / counts
    mean = jnp.sum(tsum2, axis=0, keepdims=True) / P                      # (1, Co)
    m2 = (jnp.sum(tcsq2, axis=0, keepdims=True)
          + jnp.sum(counts * (tmean - mean) ** 2, axis=0, keepdims=True))
    var = m2 / P
    invstd = jax.lax.rsqrt(var + eps)
    scale = params["gamma"] * invstd
    shift = params["beta"] - mean * scale

    out_rows = pl.pallas_call(
        _bn_relu_kernel,
        out_shape=jax.ShapeDtypeStruct((P, Co), jnp.float32),
        grid_spec=pltpu.PrefetchScalarGridSpec(
            num_scalar_prefetch=0, grid=(n_tiles,),
            in_specs=[pl.BlockSpec((tile, Co), row),
                      pl.BlockSpec((1, Co), full),
                      pl.BlockSpec((1, Co), full)],
            out_specs=pl.BlockSpec((tile, Co), row)),
        compiler_params=pltpu.CompilerParams(dimension_semantics=("parallel",)),
    )(y_pre, scale, shift)

    return jnp.transpose(out_rows.reshape(B, H, W, Co), (0, 3, 1, 2))     # NCHW


# ----------------------------------------------------------------------------
# Pure-JAX f32 reference (same math, no Pallas) for a sanity check
# ----------------------------------------------------------------------------
def reference_forward(params, mae_spatial, conv_feat, eps=1e-5):
    B, N, D = mae_spatial.shape
    H_mae = W_mae = int(round(N ** 0.5))
    _, Cc, H, W = conv_feat.shape
    Rh = jnp.asarray(_bilinear_matrix(H, H_mae))
    Rw = jnp.asarray(_bilinear_matrix(W, W_mae))
    mae_hw = mae_spatial.reshape(B, H_mae, W_mae, D)
    mae_rs = jnp.einsum("hi,bijd,wj->bhwd", Rh, mae_hw, Rw)
    conv_nhwc = jnp.transpose(conv_feat, (0, 2, 3, 1))
    mae_p = mae_rs @ params["wm"] + params["bm"][0]
    conv_p = conv_nhwc @ params["wc"] + params["bc"][0]
    hid = jnp.maximum(mae_p @ params["wa1m"] + conv_p @ params["wa1c"]
                      + params["ba1"][0], 0.0)
    logits = hid @ params["wa2"] + params["ba2"][0]
    w = jax.nn.softmax(logits, axis=-1)
    fused = w[..., 0:1] * mae_p + w[..., 1:2] * conv_p
    y = fused @ params["wo"] + params["bo"][0]
    mean = jnp.mean(y, axis=(0, 1, 2))
    var = jnp.mean((y - mean) ** 2, axis=(0, 1, 2))
    yn = (y - mean) * jax.lax.rsqrt(var + eps) * params["gamma"][0] + params["beta"][0]
    return jnp.transpose(jnp.maximum(yn, 0.0), (0, 3, 1, 2))


# ----------------------------------------------------------------------------
if __name__ == "__main__":
    B = 2
    mae_dim, conv_dim, out_dim = 32, 24, 16
    H_mae = W_mae = 4
    N = H_mae * W_mae          # 16 MAE tokens
    H = W = 8                  # conv feature resolution

    key = jax.random.PRNGKey(0)
    k_param, k_mae, k_conv = jax.random.split(key, 3)

    params = init_params(k_param, mae_dim, conv_dim, out_dim)
    mae_spatial = jax.random.normal(k_mae, (B, N, mae_dim), jnp.float32)
    conv_feat = jax.random.normal(k_conv, (B, conv_dim, H, W), jnp.float32)  # NCHW

    out = spatial_fusion_forward(params, mae_spatial, conv_feat)
    out = jax.block_until_ready(out)

    ref = reference_forward(params, mae_spatial, conv_feat)
    max_err = float(jnp.max(jnp.abs(out - ref)))
    mean_err = float(jnp.mean(jnp.abs(out - ref)))
    # Tolerances account for bf16 MXU operands vs the pure-f32 reference.
    if not (out.shape == (B, out_dim, H, W) and max_err < 0.2 and mean_err < 0.05):
        raise AssertionError(
            f"mismatch: shape={out.shape}, max_abs_err={max_err}, mean_abs_err={mean_err}")

    print("KERNEL_OK")
</pallas_src>

<mosaic_0001>
module attributes {stable_mosaic.version = 11 : i64} {
  func.func @_resize_proj_kernel(%arg0: i32, %arg1: memref<64x16xbf16, #tpu.memory_space<vmem>>, %arg2: memref<1x16x32xbf16, #tpu.memory_space<vmem>>, %arg3: memref<32x16xbf16, #tpu.memory_space<vmem>>, %arg4: memref<1x16xf32, #tpu.memory_space<vmem>>, %arg5: memref<1x64x16xbf16, #tpu.memory_space<vmem>>) attributes {dimension_semantics = [#tpu.dimension_semantics<parallel>], iteration_bounds = array<i64: 2>, scalar_prefetch = 0 : i64, scratch_operands = 0 : i64, tpu.core_type = #tpu.core_type<tc>, window_params = [{pipeline_mode = #tpu.pipeline_mode<synchronous>, transform_indices = @transform_0, window_bounds = array<i64: 64, 16>}, {transform_indices = @transform_1, window_bounds = array<i64: 1, 16, 32>}, {pipeline_mode = #tpu.pipeline_mode<synchronous>, transform_indices = @transform_2, window_bounds = array<i64: 32, 16>}, {pipeline_mode = #tpu.pipeline_mode<synchronous>, transform_indices = @transform_3, window_bounds = array<i64: 1, 16>}, {transform_indices = @transform_4, window_bounds = array<i64: 1, 64, 16>}]} {
    %c0 = arith.constant 0 : index
    %c0_0 = arith.constant 0 : index
    %c0_1 = arith.constant 0 : index
    %0 = vector.load %arg2[%c0, %c0_0, %c0_1] : memref<1x16x32xbf16, #tpu.memory_space<vmem>>, vector<1x16x32xbf16>
    %1 = vector.shape_cast %0 : vector<1x16x32xbf16> to vector<16x32xbf16>
    %c0_2 = arith.constant 0 : index
    %c0_3 = arith.constant 0 : index
    %2 = vector.load %arg3[%c0_2, %c0_3] : memref<32x16xbf16, #tpu.memory_space<vmem>>, vector<32x16xbf16>
    %cst = arith.constant dense<0.000000e+00> : vector<16x16xf32>
    %3 = tpu.matmul %1, %2, %cst {dimension_numbers = #tpu.dot_dimension_numbers<[1], [0], [0], [1], [0, 0, 1, 1], [], []>} : vector<16x32xbf16>, vector<32x16xbf16>, vector<16x16xf32> -> vector<16x16xf32>
    %c0_4 = arith.constant 0 : index
    %c0_5 = arith.constant 0 : index
    %4 = vector.load %arg1[%c0_4, %c0_5] : memref<64x16xbf16, #tpu.memory_space<vmem>>, vector<64x16xbf16>
    %5 = arith.truncf %3 : vector<16x16xf32> to vector<16x16xbf16>
    %cst_6 = arith.constant dense<0.000000e+00> : vector<64x16xf32>
    %6 = tpu.matmul %4, %5, %cst_6 {dimension_numbers = #tpu.dot_dimension_numbers<[1], [0], [0], [1], [0, 0, 1, 1], [], []>} : vector<64x16xbf16>, vector<16x16xbf16>, vector<64x16xf32> -> vector<64x16xf32>
    %c0_7 = arith.constant 0 : index
    %c0_8 = arith.constant 0 : index
    %7 = vector.load %arg4[%c0_7, %c0_8] : memref<1x16xf32, #tpu.memory_space<vmem>>, vector<1x16xf32>
    %8 = vector.broadcast %7 : vector<1x16xf32> to vector<64x16xf32>
    %9 = arith.addf %6, %8 : vector<64x16xf32>
    %10 = arith.truncf %9 : vector<64x16xf32> to vector<64x16xbf16>
    %c0_9 = arith.constant 0 : index
    %c0_10 = arith.constant 0 : index
    %c0_11 = arith.constant 0 : index
    %11 = vector.load %arg5[%c0_9, %c0_10, %c0_11] : memref<1x64x16xbf16, #tpu.memory_space<vmem>>, vector<1x64x16xbf16>
    %12 = vector.shape_cast %11 : vector<1x64x16xbf16> to vector<64x16xbf16>
    %13 = vector.shape_cast %10 : vector<64x16xbf16> to vector<1x64x16xbf16>
    tpu.vector_store %arg5[%c0_9, %c0_10, %c0_11], %13 {strides = array<i32>} : memref<1x64x16xbf16, #tpu.memory_space<vmem>>, vector<1x64x16xbf16>,
    return
  }
  func.func @transform_0(%arg0: i32) -> (i32, i32) {
    %c0_i32 = arith.constant 0 : i32
    %c0_i32_0 = arith.constant 0 : i32
    %c0_i32_1 = arith.constant 0 : i32
    return %c0_i32, %c0_i32_0 : i32, i32
  }
  func.func @transform_1(%arg0: i32) -> (i32, i32, i32) {
    %c0_i32 = arith.constant 0 : i32
    %c0_i32_0 = arith.constant 0 : i32
    %c0_i32_1 = arith.constant 0 : i32
    return %arg0, %c0_i32, %c0_i32_0 : i32, i32, i32
  }
  func.func @transform_2(%arg0: i32) -> (i32, i32) {
    %c0_i32 = arith.constant 0 : i32
    %c0_i32_0 = arith.constant 0 : i32
    %c0_i32_1 = arith.constant 0 : i32
    return %c0_i32, %c0_i32_0 : i32, i32
  }
  func.func @transform_3(%arg0: i32) -> (i32, i32) {
    %c0_i32 = arith.constant 0 : i32
    %c0_i32_0 = arith.constant 0 : i32
    %c0_i32_1 = arith.constant 0 : i32
    return %c0_i32, %c0_i32_0 : i32, i32
  }
  func.func @transform_4(%arg0: i32) -> (i32, i32, i32) {
    %c0_i32 = arith.constant 0 : i32
    %c0_i32_0 = arith.constant 0 : i32
    %c0_i32_1 = arith.constant 0 : i32
    return %arg0, %c0_i32, %c0_i32_0 : i32, i32, i32
  }
}

</mosaic_0001>

<llo_original>
// kernel: tpu_custom_call.1
$region0: #{tpu_custom_call.1}
  #allocation0 [shape = 'u32[]', space=smem, size = 0x4, offset = 0x4, fixed_abs, tag = 'smem constant byte address 0x4 - core index']
  #allocation1 [shape = 'u32[72,128]{1,0:T(1,128)}', space=vmem, size = 0x9000, scoped, tag = 'internal scratch']
  %s0 = inlined_call_operand.vmem [shape: bf16[64,16], index: 0, kind: input, shape index: {}]
  %s1 = inlined_call_operand.vmem [shape: bf16[2,16,32], index: 1, kind: input, shape index: {}]
  %s2 = inlined_call_operand.vmem [shape: bf16[32,16], index: 2, kind: input, shape index: {}]
  %s3 = inlined_call_operand.vmem [shape: f32[1,16], index: 3, kind: input, shape index: {}]
  %s4 = inlined_call_operand.vmem [shape: bf16[2,64,16], index: 4, kind: output, shape index: {}]
  %s5 = sld [smem:[#allocation0]]
  $region49: #{tpu_custom_call.1} parent=0
    _
  %s7 = ssub.s32 1, %s5
  %s8 = scalar_select 0, %s7, %s5
  loop: start=0, step=1, limit=4
  $region2: #{tpu_custom_call.1} parent=0 // loop_pre_header
    _
  $region3: #{tpu_custom_call.1} parent=0 // loop_header
    %s10 = sphi 0, %s14
    %p11 = scmp.ge.s32.totalorder %s10, 4
    %s18 = sphi 0, %s18
    %s20 = sphi 0, %s18
    %s21 = sphi 0, %s20
    %s35 = sphi 0, %s21
    %s41 = sphi 0, %s43
    %s44 = sphi 0, %s41
    %s45 = sphi 0, %s44
    %s61 = sphi 0, %s45
    %s65 = sphi 0, %s65
    %s67 = sphi 0, %s65
    %s68 = sphi 0, %s67
    %s82 = sphi 0, %s68
    %s86 = sphi 0, %s86
    %s88 = sphi 0, %s86
    %s89 = sphi 0, %s88
    %s103 = sphi 0, %s89
    %s109 = sphi 0, %s111
    %s112 = sphi 0, %s109
    %s113 = sphi 0, %s112
    %s129 = sphi 0, %s113
  $region4: #{tpu_custom_call.1} parent=0 // loop_header_branch
    %13 = sbr.rel (%p11) target = $region8
  $region5: #{tpu_custom_call.1} parent=0 // loop_body
    %s15 = ssub.s32 %s10, 1
    %s16 = ssub.s32 %s10, 2
    %s17 = sadd.s32 %s10, 1
    %s19 = sadd.s32 %s18, 1
    %p22 = scmp.eq.s32.totalorder %s10, 1
    %p23 = scmp.ne.s32.totalorder %s18, %s20
    %p24 = scmp.eq.s32.totalorder %s10, 0
    %p25 = por %p23, %p24
    %p26 = scmp.ne.s32.totalorder %s18, %s20
    %p27 = scmp.eq.s32.totalorder %s15, 1
    %p28 = por %p26, %p27
    %p29 = scmp.ne.s32.totalorder %s20, %s21
    %p30 = scmp.eq.s32.totalorder %s15, 0
    %p31 = por %p29, %p30
    %p32 = scmp.ne.s32.totalorder %s20, %s21
    %p33 = scmp.eq.s32.totalorder %s16, 1
    %p34 = por %p32, %p33
    %p36 = scmp.ne.s32.totalorder %s21, %s35
    %p37 = scmp.eq.s32.totalorder %s16, 0
    %p38 = por %p36, %p37
    %s39 = ssub.s32 %s10, %s17
    %p40 = scmp.eq.s32.totalorder %s39, 0
    %s42 = sadd.s32 %s41, 1
    %s43 = scalar_select %p40, %s41, %s42
    %p46 = pneg %p40
    %p47 = scmp.eq.s32.totalorder %s10, 1
    %p48 = por %p46, %p47
    %p49 = scmp.ne.s32.totalorder %s41, %s44
    %p50 = scmp.eq.s32.totalorder %s10, 0
    %p51 = por %p49, %p50
    %p52 = scmp.ne.s32.totalorder %s41, %s44
    %p53 = scmp.eq.s32.totalorder %s15, 1
    %p54 = por %p52, %p53
    %p55 = scmp.ne.s32.totalorder %s44, %s45
    %p56 = scmp.eq.s32.totalorder %s15, 0
    %p57 = por %p55, %p56
    %p58 = scmp.ne.s32.totalorder %s44, %s45
    %p59 = scmp.eq.s32.totalorder %s16, 1
    %p60 = por %p58, %p59
    %p62 = scmp.ne.s32.totalorder %s45, %s61
    %p63 = scmp.eq.s32.totalorder %s16, 0
    %p64 = por %p62, %p63
    %s66 = sadd.s32 %s65, 1
    %p69 = scmp.eq.s32.totalorder %s10, 1
    %p70 = scmp.ne.s32.totalorder %s65, %s67
    %p71 = scmp.eq.s32.totalorder %s10, 0
    %p72 = por %p70, %p71
    %p73 = scmp.ne.s32.totalorder %s65, %s67
    %p74 = scmp.eq.s32.totalorder %s15, 1
    %p75 = por %p73, %p74
    %p76 = scmp.ne.s32.totalorder %s67, %s68
    %p77 = scmp.eq.s32.totalorder %s15, 0
    %p78 = por %p76, %p77
    %p79 = scmp.ne.s32.totalorder %s67, %s68
    %p80 = scmp.eq.s32.totalorder %s16, 1
    %p81 = por %p79, %p80
    %p83 = scmp.ne.s32.totalorder %s68, %s82
    %p84 = scmp.eq.s32.totalorder %s16, 0
    %p85 = por %p83, %p84
    %s87 = sadd.s32 %s86, 1
    %p90 = scmp.eq.s32.totalorder %s10, 1
    %p91 = scmp.ne.s32.totalorder %s86, %s88
    %p92 = scmp.eq.s32.totalorder %s10, 0
    %p93 = por %p91, %p92
    %p94 = scmp.ne.s32.totalorder %s86, %s88
    %p95 = scmp.eq.s32.totalorder %s15, 1
    %p96 = por %p94, %p95
    %p97 = scmp.ne.s32.totalorder %s88, %s89
    %p98 = scmp.eq.s32.totalorder %s15, 0
    %p99 = por %p97, %p98
    %p100 = scmp.ne.s32.totalorder %s88, %s89
    %p101 = scmp.eq.s32.totalorder %s16, 1
    %p102 = por %p100, %p101
    %p104 = scmp.ne.s32.totalorder %s89, %s103
    %p105 = scmp.eq.s32.totalorder %s16, 0
    %p106 = por %p104, %p105
    %s107 = ssub.s32 %s10, %s17
    %p108 = scmp.eq.s32.totalorder %s107, 0
    %s110 = sadd.s32 %s109, 1
    %s111 = scalar_select %p108, %s109, %s110
    %p114 = pneg %p108
    %p115 = scmp.eq.s32.totalorder %s10, 1
    %p116 = por %p114, %p115
    %p117 = scmp.ne.s32.totalorder %s109, %s112
    %p118 = scmp.eq.s32.totalorder %s10, 0
    %p119 = por %p117, %p118
    %p120 = scmp.ne.s32.totalorder %s109, %s112
    %p121 = scmp.eq.s32.totalorder %s15, 1
    %p122 = por %p120, %p121
    %p123 = scmp.ne.s32.totalorder %s112, %s113
    %p124 = scmp.eq.s32.totalorder %s15, 0
    %p125 = por %p123, %p124
    %p126 = scmp.ne.s32.totalorder %s112, %s113
    %p127 = scmp.eq.s32.totalorder %s16, 1
    %p128 = por %p126, %p127
    %p130 = scmp.ne.s32.totalorder %s113, %s129
    %p131 = scmp.eq.s32.totalorder %s16, 0
    %p132 = por %p130, %p131
    %p133 = scmp.le.s32.totalorder 1, %s10
    %p134 = scmp.lt.s32.totalorder %s10, 3
    %p135 = pnand %p133, %p134
    %p136 = pneg %p135
    // Predicated region
    $region9: #{tpu_custom_call.1} parent=5 // pred_check
      _
    $region10: #{tpu_custom_call.1} parent=5 // pred_check_branch
      %138 = sbr.rel (%p135) target = $region12
    $region11: #{tpu_custom_call.1} parent=5 // pred_region
      %s139 = ssub.s32 %s10, 1
      // Predicated region
      $region13: #{tpu_custom_call.1} parent=11 // pred_check
        %p140 = pneg %p31
      $region14: #{tpu_custom_call.1} parent=11 // pred_check_branch
        %142 = sbr.rel (%p140) target = $region16
      $region15: #{tpu_custom_call.1} parent=11 // pred_region
        _
      $region16: #{tpu_custom_call.1} parent=11 // pred_fallthru
        _
      // Predicated region
      $region17: #{tpu_custom_call.1} parent=11 // pred_check
        %p143 = pneg %p78
      $region18: #{tpu_custom_call.1} parent=11 // pred_check_branch
        %145 = sbr.rel (%p143) target = $region20
      $region19: #{tpu_custom_call.1} parent=11 // pred_region
        _
      $region20: #{tpu_custom_call.1} parent=11 // pred_fallthru
        _
      // Predicated region
      $region21: #{tpu_custom_call.1} parent=11 // pred_check
        %p146 = pneg %p99
      $region22: #{tpu_custom_call.1} parent=11 // pred_check_branch
        %148 = sbr.rel (%p146) target = $region24
      $region23: #{tpu_custom_call.1} parent=11 // pred_region
        _
      $region24: #{tpu_custom_call.1} parent=11 // pred_fallthru
        _
    $region12: #{tpu_custom_call.1} parent=5 // pred_fallthru
      _
    %p149 = scmp.lt.s32.totalorder %s10, 2
    // Predicated region
    $region25: #{tpu_custom_call.1} parent=5 // pred_check
      %p150 = pneg %p149
    $region26: #{tpu_custom_call.1} parent=5 // pred_check_branch
      %152 = sbr.rel (%p150) target = $region28
    $region27: #{tpu_custom_call.1} parent=5 // pred_region
      // Predicated region
      $region29: #{tpu_custom_call.1} parent=27 // pred_check
        %p153 = pneg %p51
      $region30: #{tpu_custom_call.1} parent=27 // pred_check_branch
        %155 = sbr.rel (%p153) target = $region32
      $region31: #{tpu_custom_call.1} parent=27 // pred_region
        %p156 = scmp.lt.s32.totalorder %s10, 1
        %s157 = scalar_select %p156, %s10, 1
        %s158 = smul.addr %s157, 2
        %s159 = smul.addr %s158, 4
        %s160 = scalar_lea.vmem %s1, %s159
      $region32: #{tpu_custom_call.1} parent=27 // pred_fallthru
        _
    $region28: #{tpu_custom_call.1} parent=5 // pred_fallthru
      _
    %p161 = scmp.le.s32.totalorder 1, %s10
    %p162 = scmp.lt.s32.totalorder %s10, 3
    %p163 = pnand %p161, %p162
    %p164 = pneg %p163
    // Predicated region
    $region33: #{tpu_custom_call.1} parent=5 // pred_check
      _
    $region34: #{tpu_custom_call.1} parent=5 // pred_check_branch
      %166 = sbr.rel (%p163) target = $region36
    $region35: #{tpu_custom_call.1} parent=5 // pred_region
      %s167 = ssub.s32 %s10, 1
      %p168 = pneg %p31
      %p169 = pneg %p28
      %p170 = scmp.lt.s32.totalorder %s15, 1
      %s171 = scalar_select %p170, %s15, 1
      %s172 = smul.addr %s171, 2
      %s173 = smul.addr %s172, 4
      %s174 = scalar_lea.vmem %s1, %s173
      %p175 = pneg %p57
      %p176 = pneg %p54
      %p177 = pneg %p78
      %p178 = pneg %p75
      %p179 = pneg %p99
      %p180 = pneg %p96
      %p181 = pneg %p125
      %p182 = pneg %p122
      %p183 = scmp.lt.s32.totalorder %s15, 1
      %s184 = scalar_select %p183, %s15, 1
      %s185 = smul.addr %s184, 8
      %s186 = smul.addr %s185, 4
      %s187 = scalar_lea.vmem %s4, %s186
      %p188 = scmp.lt.s32.totalorder %s15, 1
      %s189 = scalar_select %p188, %s15, 1
      %s190 = smul.addr %s189, 2
      %s191 = smul.addr %s190, 4
      %s192 = scalar_lea.vmem %s1, %s191
      %p193 = scmp.lt.s32.totalorder %s15, 1
      %s194 = scalar_select %p193, %s15, 1
      %s195 = smul.addr %s194, 8
      %s196 = smul.addr %s195, 4
      %s197 = scalar_lea.vmem %s4, %s196
      %v199 = vld [vmem:[%s192] sm:$0xf]
      %v200 = vld [vmem:[%s192 + $0x4] sm:$0xf]
      %v201 = vld [vmem:[%s2] sm:$0xf]
      %v202 = vld [vmem:[%s2 + $0x4] sm:$0xf]
      %v203 = vld [vmem:[%s2 + $0x8] sm:$0xf]
      %v204 = vld [vmem:[%s2 + $0xc] sm:$0xf]
      %v207 = vunpack.c.l.b16 %v199
      %v208 = vunpack.c.l.b16 %v200
      %v209 = vpack.c.b16 %v208, %v207
      %v214 = vunpack.c.l.b16 %v201
      %v215 = vunpack.c.l.b16 %v202
      %v216 = vunpack.c.l.b16 %v203
      %v217 = vunpack.c.l.b16 %v204
      %v218 = vpack.c.b16 %v215, %v214
      %v219 = vpack.c.b16 %v217, %v216
      %vm222 = vcmask 261120
      %v224 = vsel %vm222, %v209, 0
      %226 = vmatpush.bf16.msra.mxu0 0
      %227 = vmatpush.bf16.msra.mxu0 0
      %228 = vmatpush.bf16.msra.mxu0 0
      %229 = vmatpush.bf16.msra.mxu0 0
      %230 = vmatpush.bf16.msra.mxu0 0
      %231 = vmatpush.bf16.msra.mxu0 0
      %232 = vmatpush.bf16.msra.mxu0 %v219
      %233 = vmatpush.bf16.msra.mxu0 %v218
      %234 = vmatmul.bf16.gmra.mxu0 %v224
      %v235 = vpop.f32.mrf.mxu0
      %v236 = vadd.f32 0.0, %v235
      %v237 = vpop.f32.mrf.mxu0
      %v238 = vadd.f32 0.0, %v237
      %239 = vdwg.mxu0
      %v240 = vld [vmem:[%s0] sm:$0xf]
      %v241 = vld [vmem:[%s0 + $0x4] sm:$0xf]
      %v242 = vld [vmem:[%s0 + $0x8] sm:$0xf]
      %v243 = vld [vmem:[%s0 + $0xc] sm:$0xf]
      %v244 = vld [vmem:[%s0 + $0x10] sm:$0xf]
      %v245 = vld [vmem:[%s0 + $0x14] sm:$0xf]
      %v246 = vld [vmem:[%s0 + $0x18] sm:$0xf]
      %v247 = vld [vmem:[%s0 + $0x1c] sm:$0xf]
      %v248 = vpack.c.bf16 %v238, %v236
      %v249 = vld [vmem:[%s3] sm:$0x1]
      %v251 = vperm.slane %v249, 0
      %v261 = vunpack.c.l.b16 %v240
      %v262 = vunpack.c.l.b16 %v241
      %v263 = vunpack.c.l.b16 %v242
      %v264 = vunpack.c.l.b16 %v243
      %v265 = vunpack.c.l.b16 %v244
      %v266 = vunpack.c.l.b16 %v245
      %v267 = vunpack.c.l.b16 %v246
      %v268 = vunpack.c.l.b16 %v247
      %v269 = vpack.c.b16 %v262, %v261
      %v270 = vpack.c.b16 %v264, %v263
      %v271 = vpack.c.b16 %v266, %v265
      %v272 = vpack.c.b16 %v268, %v267
      %vm273 = vcmask 130048
      %v275 = vsel %vm273, %v269, 0
      %v278 = vsel %vm273, %v270, 0
      %v281 = vsel %vm273, %v271, 0
      %v284 = vsel %vm273, %v272, 0
      %286 = vmatpush.bf16.msra.mxu0 0
      %287 = vmatpush.bf16.msra.mxu0 0
      %288 = vmatpush.bf16.msra.mxu0 0
      %289 = vmatpush.bf16.msra.mxu0 0
      %290 = vmatpush.bf16.msra.mxu0 0
      %291 = vmatpush.bf16.msra.mxu0 0
      %292 = vmatpush.bf16.msra.mxu0 0
      %293 = vmatpush.bf16.msra.mxu0 %v248
      %294 = vmatmul.bf16.gmra.mxu0 %v275
      %v295 = vpop.f32.mrf.mxu0
      %v296 = vadd.f32 %v251, %v295
      %v297 = vpop.f32.mrf.mxu0
      %v298 = vadd.f32 %v251, %v297
      %299 = vmatmul.bf16.gmra.mxu0 %v278
      %v300 = vpop.f32.mrf.mxu0
      %v301 = vadd.f32 %v251, %v300
      %v302 = vpop.f32.mrf.mxu0
      %v303 = vadd.f32 %v251, %v302
      %304 = vmatmul.bf16.gmra.mxu0 %v281
      %v305 = vpop.f32.mrf.mxu0
      %v306 = vadd.f32 %v251, %v305
      %v307 = vpop.f32.mrf.mxu0
      %v308 = vadd.f32 %v251, %v307
      %309 = vmatmul.bf16.gmra.mxu0 %v284
      %v310 = vpop.f32.mrf.mxu0
      %v311 = vadd.f32 %v251, %v310
      %v312 = vpop.f32.mrf.mxu0
      %v313 = vadd.f32 %v251, %v312
      %314 = vdwg.mxu0
      %v315 = vpack.c.bf16 %v296, %v296
      %v316 = vpack.c.bf16 %v298, %v298
      %v317 = vpack.c.bf16 %v301, %v301
      %v318 = vpack.c.bf16 %v303, %v303
      %v319 = vpack.c.bf16 %v306, %v306
      %v320 = vpack.c.bf16 %v308, %v308
      %v321 = vpack.c.bf16 %v311, %v311
      %v322 = vpack.c.bf16 %v313, %v313
      %vm323 = vcmask 125952
      %324 = vst.msk [vmem:[%s197] sm:$0xf] %vm323, %v315
      %325 = vst.msk [vmem:[%s197 + $0x4] sm:$0xf] %vm323, %v316
      %326 = vst.msk [vmem:[%s197 + $0x8] sm:$0xf] %vm323, %v317
      %327 = vst.msk [vmem:[%s197 + $0xc] sm:$0xf] %vm323, %v318
      %328 = vst.msk [vmem:[%s197 + $0x10] sm:$0xf] %vm323, %v319
      %329 = vst.msk [vmem:[%s197 + $0x14] sm:$0xf] %vm323, %v320
      %330 = vst.msk [vmem:[%s197 + $0x18] sm:$0xf] %vm323, %v321
      %331 = vst.msk [vmem:[%s197 + $0x1c] sm:$0xf] %vm323, %v322
      %p332 = scmp.lt.s32.totalorder %s15, 1
      %s333 = scalar_select %p332, %s15, 1
      %s334 = smul.addr %s333, 8
      %s335 = smul.addr %s334, 4
      %s336 = scalar_lea.vmem %s4, %s335
      // Predicated region
      $region37: #{tpu_custom_call.1} parent=35 // pred_check
        %p337 = pneg %p122
      $region38: #{tpu_custom_call.1} parent=35 // pred_check_branch
        %339 = sbr.rel (%p337) target = $region40
      $region39: #{tpu_custom_call.1} parent=35 // pred_region
        _
      $region40: #{tpu_custom_call.1} parent=35 // pred_fallthru
        _
    $region36: #{tpu_custom_call.1} parent=5 // pred_fallthru
      _
    %p340 = scmp.le.s32.totalorder 2, %s10
    // Predicated region
    $region41: #{tpu_custom_call.1} parent=5 // pred_check
      %p341 = pneg %p340
    $region42: #{tpu_custom_call.1} parent=5 // pred_check_branch
      %343 = sbr.rel (%p341) target = $region44
    $region43: #{tpu_custom_call.1} parent=5 // pred_region
      %s344 = ssub.s32 %s10, 2
      // Predicated region
      $region45: #{tpu_custom_call.1} parent=43 // pred_check
        %p345 = pneg %p128
      $region46: #{tpu_custom_call.1} parent=43 // pred_check_branch
        %347 = sbr.rel (%p345) target = $region48
      $region47: #{tpu_custom_call.1} parent=43 // pred_region
        %p348 = scmp.lt.s32.totalorder %s16, 1
        %s349 = scalar_select %p348, %s16, 1
        %s350 = smul.addr %s349, 8
        %s351 = smul.addr %s350, 4
        %s352 = scalar_lea.vmem %s4, %s351
      $region48: #{tpu_custom_call.1} parent=43 // pred_fallthru
        _
    $region44: #{tpu_custom_call.1} parent=5 // pred_fallthru
      _
  $region6: #{tpu_custom_call.1} parent=0 // loop_footer
    %s14 = sadd.s32 1, %s10
  $region7: #{tpu_custom_call.1} parent=0 // loop_footer_branch
    %9 = sbr.rel target = $region3
  $region8: #{tpu_custom_call.1} parent=0 // loop_exit
    _

</llo_original>
